<compile_context>
chip_gen: v7x
topology: tpu7x:2x2x1
jax: 0.10.0
libtpu: 0.0.40
codegen_flags: <defaults>
</compile_context>

<pallas_src>
import functools
import math

import jax
import jax.numpy as jnp
from jax.experimental import pallas as pl
from jax.experimental.pallas import tpu as pltpu


def _cdiv(a, b):
    return -(-a // b)


def _round_up(a, b):
    return _cdiv(a, b) * b


def _selfattn_kernel(w_ref, v_ref, h_ref, o_ref, *, L, spt, elem_dtype):
    # (P, P) @ (P, tile_n) on the MXU with f32 accumulation (operands may be bf16).
    wh = jnp.dot(w_ref[...], h_ref[...], preferred_element_type=jnp.float32)

    # tanh on the EUP. bf16 path (~2x) when elem_dtype=bf16 (v6e/v7x); f32 on v5e.
    t = jnp.tanh(wh.astype(elem_dtype)).astype(jnp.float32)

    # attn_energies = v_a . tanh(W_a H): VPU broadcast-multiply + sublane reduce.
    e = jnp.sum(v_ref[...] * t, axis=0, keepdims=True)          # (1, tile_n) f32

    # Per-sequence softmax with no selector matmul / reshape / roll:
    # lanes are interleaved per tile (column l*spt + b <-> sequence b, position l), so
    # chunk j = e[:, j*spt:(j+1)*spt] holds position j of every sequence in the tile and
    # the per-sequence max / sum are plain elementwise reductions over the L static chunks.
    e_chunks = [e[:, j * spt:(j + 1) * spt] for j in range(L)]
    m = e_chunks[0]
    for c in e_chunks[1:]:
        m = jnp.maximum(m, c)                                    # true per-sequence max
    p_chunks = [jnp.exp(c - m) for c in e_chunks]                # EUP exp
    denom = p_chunks[0]
    for c in p_chunks[1:]:
        denom = denom + c                                        # per-sequence sum
    inv = 1.0 / denom          # exact: weights sum to 1 (approx vrcp broke this before)

    # Lane-dense (1, tile_n) slab store (tile_n is always a multiple of 128).
    o_ref[...] = jnp.concatenate([c * inv for c in p_chunks], axis=1).astype(o_ref.dtype)


def self_attn_batched(W_a, v_a, H_batch, *, target_lanes=4096, min_tiles=1,
                      compute_dtype=jnp.float32, vmem_budget_bytes=8 << 20):
    """Apply SelfAttn.forward to every H in the batch.

    W_a: (P, P), v_a: (1, P), H_batch: (B, P, L)  ->  attn_weights: (B, 1, L) float32.

    compute_dtype=jnp.bfloat16 enables the bf16 H-stream + MXU/EUP path (recommended on
    v6e/v7x; keep float32 on v5e).  min_tiles=2 is recommended on v7x so both
    TensorCores receive grid slices.
    """
    B, P, L = H_batch.shape
    assert W_a.shape == (P, P) and v_a.shape == (1, P)
    compute_dtype = jnp.dtype(compute_dtype)

    # ---- tile sizing --------------------------------------------------------------
    unit = math.lcm(L, 128) // L        # fewest sequences giving a 128-multiple of lanes
    itemsize = compute_dtype.itemsize
    # Cap the tile so the double-buffered H stream stays inside a small VMEM budget
    # (well under v5e's 16 MiB scoped default and v7x's 64 MiB physical VMEM).
    max_lanes = max(128, ((vmem_budget_bytes // (2 * P * itemsize)) // 128) * 128)
    lanes = min(target_lanes, max_lanes)
    spt = unit * max(1, lanes // (unit * L))        # sequences per tile (~target lanes)
    spt = min(spt, _round_up(B, unit))              # never exceed padded batch (no waste)
    if min_tiles > 1:                               # v7x: give each TensorCore >=1 tile
        spt = min(spt, max(unit, _round_up(_cdiv(B, min_tiles), unit)))
    n_tiles = _cdiv(B, spt)
    B_pad = n_tiles * spt
    tile_n = spt * L                                # multiple of 128 by construction

    # ---- wrapper-side relayout ------------------------------------------------------
    # TODO(synk): produce H directly in (P, n_tiles, L, spt) layout upstream; this
    # transpose/pad is an HBM read+write of all of H that a mem-bound kernel cannot hide.
    Hc = H_batch.astype(compute_dtype)              # cast first: halves relayout traffic in bf16
    if B_pad != B:
        Hc = jnp.pad(Hc, ((0, B_pad - B), (0, 0), (0, 0)))  # zero seqs -> uniform, discarded
    H_stacked = (
        Hc.reshape(n_tiles, spt, P, L)
          .transpose(2, 0, 3, 1)                    # (P, n_tiles, L, spt)
          .reshape(P, B_pad * L)                    # column index = i*tile_n + l*spt + b
    )
    W_c = W_a.astype(compute_dtype)
    v_col = v_a.reshape(P, 1).astype(jnp.float32)

    kernel = functools.partial(_selfattn_kernel, L=L, spt=spt, elem_dtype=compute_dtype)

    out = pl.pallas_call(
        kernel,
        out_shape=jax.ShapeDtypeStruct((1, B_pad * L), jnp.float32),
        grid_spec=pltpu.PrefetchScalarGridSpec(
            num_scalar_prefetch=0,
            grid=(n_tiles,),
            in_specs=[
                pl.BlockSpec((P, P), lambda i: (0, 0)),        # W_a: resident
                pl.BlockSpec((P, 1), lambda i: (0, 0)),        # v_a column: resident
                pl.BlockSpec((P, tile_n), lambda i: (0, i)),   # H tile (lane-dense stream)
            ],
            out_specs=pl.BlockSpec((1, tile_n), lambda i: (0, i)),  # lane-dense output slab
        ),
        compiler_params=pltpu.CompilerParams(
            dimension_semantics=("parallel",),      # independent tiles (v7x 2-TC megacore)
        ),
    )(W_c, v_col, H_stacked)

    # Undo the lane interleave (layout plumbing only), drop padding, view as (B, 1, L).
    attn = (
        out.reshape(n_tiles, L, spt)
           .transpose(0, 2, 1)                      # (n_tiles, spt, L)
           .reshape(B_pad, L)[:B]
           .reshape(B, 1, L)
    )
    return attn


def self_attn(W_a, v_a, H):
    """Exact single-sequence equivalent of the PyTorch module: H (P, L) -> (1, L)."""
    return self_attn_batched(W_a, v_a, H[None])[0]


def _reference(W_a, v_a, H_batch):
    wh = jnp.einsum('pq,bql->bpl', W_a, H_batch)
    e = jnp.einsum('op,bpl->bol', v_a, jnp.tanh(wh))
    return jax.nn.softmax(e, axis=-1)


if __name__ == "__main__":
    P, L = 32, 8
    key = jax.random.PRNGKey(0)
    k_w, k_v, k_h = jax.random.split(key, 3)

    # Deterministic synthetic parameters (module __init__ only defines shapes).
    W_a = jax.random.normal(k_w, (P, P), dtype=jnp.float32) * 0.1
    v_a = jax.random.normal(k_v, (1, P), dtype=jnp.float32) * 0.1

    # --- Primary case: 16 sequences -> one 128-lane tile (f32, exact path) ---
    B = 16
    H_batch = jax.random.normal(k_h, (B, P, L), dtype=jnp.float32)
    out = jax.block_until_ready(self_attn_batched(W_a, v_a, H_batch))
    ref = _reference(W_a, v_a, H_batch)
    assert out.shape == (B, 1, L)
    assert jnp.allclose(out, ref, atol=1e-3, rtol=1e-3), "batched mismatch vs reference"
    assert jnp.allclose(jnp.sum(out, axis=-1), 1.0, atol=1e-3), "weights do not sum to 1"

    # --- Multi-tile + padding path: 80 sequences, small tiles, >=2 tiles (v7x split) ---
    B2 = 80
    H_batch2 = jax.random.normal(jax.random.PRNGKey(1), (B2, P, L), dtype=jnp.float32)
    out2 = jax.block_until_ready(
        self_attn_batched(W_a, v_a, H_batch2, target_lanes=256, min_tiles=2))
    ref2 = _reference(W_a, v_a, H_batch2)
    assert out2.shape == (B2, 1, L)
    assert jnp.allclose(out2, ref2, atol=1e-3, rtol=1e-3), "tiled mismatch vs reference"

    # --- bf16 MXU/EUP + bf16 H-stream path (v6e/v7x); looser tolerance ---
    out3 = jax.block_until_ready(
        self_attn_batched(W_a, v_a, H_batch, compute_dtype=jnp.bfloat16))
    assert out3.shape == (B, 1, L)
    assert jnp.allclose(out3, ref, atol=2e-2, rtol=2e-2), "bf16 path mismatch vs reference"

    # --- Single-sequence call, exactly matching the original module signature ---
    out1 = jax.block_until_ready(self_attn(W_a, v_a, H_batch[0]))
    assert out1.shape == (1, L)
    assert jnp.allclose(out1, ref[0], atol=1e-3, rtol=1e-3), "single-seq mismatch"

    print("KERNEL_OK")
</pallas_src>

<mosaic_0001>
module attributes {stable_mosaic.version = 11 : i64} {
  func.func @_selfattn_kernel(%arg0: i32, %arg1: memref<32x32xf32, #tpu.memory_space<vmem>>, %arg2: memref<32x1xf32, #tpu.memory_space<vmem>>, %arg3: memref<32x128xf32, #tpu.memory_space<vmem>>, %arg4: memref<1x128xf32, #tpu.memory_space<vmem>>) attributes {dimension_semantics = [#tpu.dimension_semantics<parallel>], iteration_bounds = array<i64: 1>, scalar_prefetch = 0 : i64, scratch_operands = 0 : i64, tpu.core_type = #tpu.core_type<tc>, window_params = [{pipeline_mode = #tpu.pipeline_mode<synchronous>, transform_indices = @transform_0, window_bounds = array<i64: 32, 32>}, {pipeline_mode = #tpu.pipeline_mode<synchronous>, transform_indices = @transform_1, window_bounds = array<i64: 32, 1>}, {transform_indices = @transform_2, window_bounds = array<i64: 32, 128>}, {transform_indices = @transform_3, window_bounds = array<i64: 1, 128>}]} {
    %c0 = arith.constant 0 : index
    %c0_0 = arith.constant 0 : index
    %0 = vector.load %arg1[%c0, %c0_0] : memref<32x32xf32, #tpu.memory_space<vmem>>, vector<32x32xf32>
    %c0_1 = arith.constant 0 : index
    %c0_2 = arith.constant 0 : index
    %1 = vector.load %arg3[%c0_1, %c0_2] : memref<32x128xf32, #tpu.memory_space<vmem>>, vector<32x128xf32>
    %cst = arith.constant dense<0.000000e+00> : vector<32x128xf32>
    %2 = tpu.matmul %0, %1, %cst {dimension_numbers = #tpu.dot_dimension_numbers<[1], [0], [0], [1], [0, 0, 1, 1], [], []>} : vector<32x32xf32>, vector<32x128xf32>, vector<32x128xf32> -> vector<32x128xf32>
    %3 = math.tanh %2 : vector<32x128xf32>
    %c0_3 = arith.constant 0 : index
    %c0_4 = arith.constant 0 : index
    %4 = vector.load %arg2[%c0_3, %c0_4] : memref<32x1xf32, #tpu.memory_space<vmem>>, vector<32x1xf32>
    %5 = vector.broadcast %4 : vector<32x1xf32> to vector<32x128xf32>
    %6 = arith.mulf %5, %3 : vector<32x128xf32>
    %cst_5 = arith.constant dense<0.000000e+00> : vector<128xf32>
    %7 = vector.multi_reduction <add>, %6, %cst_5 [0] : vector<32x128xf32> to vector<128xf32>
    %8 = vector.shape_cast %7 : vector<128xf32> to vector<1x128xf32>
    %9 = vector.extract_strided_slice %8 {offsets = [0, 0], sizes = [1, 16], strides = [1, 1]} : vector<1x128xf32> to vector<1x16xf32>
    %10 = vector.extract_strided_slice %8 {offsets = [0, 16], sizes = [1, 16], strides = [1, 1]} : vector<1x128xf32> to vector<1x16xf32>
    %11 = vector.extract_strided_slice %8 {offsets = [0, 32], sizes = [1, 16], strides = [1, 1]} : vector<1x128xf32> to vector<1x16xf32>
    %12 = vector.extract_strided_slice %8 {offsets = [0, 48], sizes = [1, 16], strides = [1, 1]} : vector<1x128xf32> to vector<1x16xf32>
    %13 = vector.extract_strided_slice %8 {offsets = [0, 64], sizes = [1, 16], strides = [1, 1]} : vector<1x128xf32> to vector<1x16xf32>
    %14 = vector.extract_strided_slice %8 {offsets = [0, 80], sizes = [1, 16], strides = [1, 1]} : vector<1x128xf32> to vector<1x16xf32>
    %15 = vector.extract_strided_slice %8 {offsets = [0, 96], sizes = [1, 16], strides = [1, 1]} : vector<1x128xf32> to vector<1x16xf32>
    %16 = vector.extract_strided_slice %8 {offsets = [0, 112], sizes = [1, 16], strides = [1, 1]} : vector<1x128xf32> to vector<1x16xf32>
    %17 = arith.maximumf %9, %10 : vector<1x16xf32>
    %18 = arith.maximumf %17, %11 : vector<1x16xf32>
    %19 = arith.maximumf %18, %12 : vector<1x16xf32>
    %20 = arith.maximumf %19, %13 : vector<1x16xf32>
    %21 = arith.maximumf %20, %14 : vector<1x16xf32>
    %22 = arith.maximumf %21, %15 : vector<1x16xf32>
    %23 = arith.maximumf %22, %16 : vector<1x16xf32>
    %24 = arith.subf %9, %23 : vector<1x16xf32>
    %25 = math.exp %24 : vector<1x16xf32>
    %26 = arith.subf %10, %23 : vector<1x16xf32>
    %27 = math.exp %26 : vector<1x16xf32>
    %28 = arith.subf %11, %23 : vector<1x16xf32>
    %29 = math.exp %28 : vector<1x16xf32>
    %30 = arith.subf %12, %23 : vector<1x16xf32>
    %31 = math.exp %30 : vector<1x16xf32>
    %32 = arith.subf %13, %23 : vector<1x16xf32>
    %33 = math.exp %32 : vector<1x16xf32>
    %34 = arith.subf %14, %23 : vector<1x16xf32>
    %35 = math.exp %34 : vector<1x16xf32>
    %36 = arith.subf %15, %23 : vector<1x16xf32>
    %37 = math.exp %36 : vector<1x16xf32>
    %38 = arith.subf %16, %23 : vector<1x16xf32>
    %39 = math.exp %38 : vector<1x16xf32>
    %40 = arith.addf %25, %27 : vector<1x16xf32>
    %41 = arith.addf %40, %29 : vector<1x16xf32>
    %42 = arith.addf %41, %31 : vector<1x16xf32>
    %43 = arith.addf %42, %33 : vector<1x16xf32>
    %44 = arith.addf %43, %35 : vector<1x16xf32>
    %45 = arith.addf %44, %37 : vector<1x16xf32>
    %46 = arith.addf %45, %39 : vector<1x16xf32>
    %cst_6 = arith.constant 1.000000e+00 : f32
    %47 = vector.broadcast %cst_6 : f32 to vector<1x16xf32>
    %48 = arith.divf %47, %46 : vector<1x16xf32>
    %49 = arith.mulf %25, %48 : vector<1x16xf32>
    %50 = arith.mulf %27, %48 : vector<1x16xf32>
    %51 = arith.mulf %29, %48 : vector<1x16xf32>
    %52 = arith.mulf %31, %48 : vector<1x16xf32>
    %53 = arith.mulf %33, %48 : vector<1x16xf32>
    %54 = arith.mulf %35, %48 : vector<1x16xf32>
    %55 = arith.mulf %37, %48 : vector<1x16xf32>
    %56 = arith.mulf %39, %48 : vector<1x16xf32>
    %57 = tpu.concatenate %49, %50, %51, %52, %53, %54, %55, %56 in 1 : vector<1x16xf32>, vector<1x16xf32>, vector<1x16xf32>, vector<1x16xf32>, vector<1x16xf32>, vector<1x16xf32>, vector<1x16xf32>, vector<1x16xf32> -> vector<1x128xf32>
    %c0_7 = arith.constant 0 : index
    %c0_8 = arith.constant 0 : index
    %58 = vector.load %arg4[%c0_7, %c0_8] : memref<1x128xf32, #tpu.memory_space<vmem>>, vector<1x128xf32>
    tpu.vector_store %arg4[%c0_7, %c0_8], %57 {strides = array<i32>} : memref<1x128xf32, #tpu.memory_space<vmem>>, vector<1x128xf32>,
    return
  }
  func.func @transform_0(%arg0: i32) -> (i32, i32) {
    %c0_i32 = arith.constant 0 : i32
    %c0_i32_0 = arith.constant 0 : i32
    %c0_i32_1 = arith.constant 0 : i32
    return %c0_i32, %c0_i32_0 : i32, i32
  }
  func.func @transform_1(%arg0: i32) -> (i32, i32) {
    %c0_i32 = arith.constant 0 : i32
    %c0_i32_0 = arith.constant 0 : i32
    %c0_i32_1 = arith.constant 0 : i32
    return %c0_i32, %c0_i32_0 : i32, i32
  }
  func.func @transform_2(%arg0: i32) -> (i32, i32) {
    %c0_i32 = arith.constant 0 : i32
    %c0_i32_0 = arith.constant 0 : i32
    return %c0_i32, %arg0 : i32, i32
  }
  func.func @transform_3(%arg0: i32) -> (i32, i32) {
    %c0_i32 = arith.constant 0 : i32
    %c0_i32_0 = arith.constant 0 : i32
    return %c0_i32, %arg0 : i32, i32
  }
}

</mosaic_0001>

<llo_original>
// kernel: tpu_custom_call.1
$region0: #{tpu_custom_call.1}
  #allocation0 [shape = 'u32[]', space=smem, size = 0x4, offset = 0x4, fixed_abs, tag = 'smem constant byte address 0x4 - core index']
  #allocation1 [shape = 'u32[144,128]{1,0:T(1,128)}', space=vmem, size = 0x12000, scoped, tag = 'internal scratch']
  %s0 = inlined_call_operand.vmem [shape: f32[32,32], index: 0, kind: input, shape index: {}]
  %s1 = inlined_call_operand.vmem [shape: f32[32,1], index: 1, kind: input, shape index: {}]
  %s2 = inlined_call_operand.hbm [shape: f32[32,128], index: 2, kind: input, shape index: {}]
  %s3 = inlined_call_operand.hbm [shape: f32[1,128], index: 3, kind: output, shape index: {}]
  %s4 = sld [smem:[#allocation0]]
  $region26: #{tpu_custom_call.1} parent=0
    _
  %s6 = ssub.s32 1, %s4
  %s7 = scalar_select 0, %s6, %s4
  $region1: #{tpu_custom_call.1} parent=0
    #allocation2 [shape = 'u8[16384]{0}', space=vmem, size = 0x4000, scoped, tag = 'input window, operand 2, single buffered']
    #allocation3 [shape = 's32[1]{0}', space=sflag, size = 0x4, scoped, tag = 'scoped memory for tpu_custom_call.1']
    #allocation4 [shape = 's32[1]{0}', space=sflag, size = 0x4, scoped, tag = 'scoped memory for tpu_custom_call.1']
    #allocation5 [shape = 'u8[512]{0}', space=vmem, size = 0x400, scoped, tag = 'output window, operand 0, single buffered']
    %8 = vsyncpa [#allocation3], 0
    %9 = vsyncpa [#allocation4], 0
    // Predicated region
    $region2: #{tpu_custom_call.1} parent=1 // pred_check
      _
    $region3: #{tpu_custom_call.1} parent=1 // pred_check_branch
      %11 = sbr.rel (0) target = $region5
    $region4: #{tpu_custom_call.1} parent=1 // pred_region
      _
    $region5: #{tpu_custom_call.1} parent=1 // pred_fallthru
      _
    // Predicated region
    $region6: #{tpu_custom_call.1} parent=1 // pred_check
      _
    $region7: #{tpu_custom_call.1} parent=1 // pred_check_branch
      %13 = sbr.rel (0) target = $region9
    $region8: #{tpu_custom_call.1} parent=1 // pred_region
      _
    $region9: #{tpu_custom_call.1} parent=1 // pred_fallthru
      _
    // Predicated region
    $region10: #{tpu_custom_call.1} parent=1 // pred_check
      _
    $region11: #{tpu_custom_call.1} parent=1 // pred_check_branch
      %15 = sbr.rel (0) target = $region13
    $region12: #{tpu_custom_call.1} parent=1 // pred_region
      %s17 = ssub.s32 512, 512
      %18 = vsyncadd [#allocation3], %s17
      %s19 = sshll.u32 [#allocation2], 4
      %s20 = int_to_ptr.vmem [resolvable:$true] %s19
      %25 = dma.hbm_to_vmem [thread:$0]  %s2, 512, %s20, [#allocation3], 128, 128, 8
    $region13: #{tpu_custom_call.1} parent=1 // pred_fallthru
      _
    // Predicated region
    $region14: #{tpu_custom_call.1} parent=1 // pred_check
      _
    $region15: #{tpu_custom_call.1} parent=1 // pred_check_branch
      %27 = sbr.rel (0) target = $region17
    $region16: #{tpu_custom_call.1} parent=1 // pred_region
      %28 = dma.done [#allocation3], 512
    $region17: #{tpu_custom_call.1} parent=1 // pred_fallthru
      _
    %v29 = vld [vmem:[%s0] sm:$0xff]
    %v30 = vld [vmem:[%s0 + $0x8] sm:$0xff]
    %v31 = vld [vmem:[%s0 + $0x10] sm:$0xff]
    %v32 = vld [vmem:[%s0 + $0x18] sm:$0xff]
    %v33 = vld [vmem:[#allocation2] sm:$0xff]
    %v34 = vld [vmem:[#allocation2 + $0x8] sm:$0xff]
    %v35 = vld [vmem:[#allocation2 + $0x10] sm:$0xff]
    %v36 = vld [vmem:[#allocation2 + $0x18] sm:$0xff]
    %vm37 = vcmask 261120
    %v39 = vsel %vm37, %v29, 0
    %v42 = vsel %vm37, %v30, 0
    %v45 = vsel %vm37, %v31, 0
    %v48 = vsel %vm37, %v32, 0
    %50 = vmatprep.subr.mxu0 0.0
    %51 = vmatpush1.msra.mxu0 %v33
    %52 = vmatprep.subr.mxu0 0.0
    %53 = vmatpush1.msra.mxu0 %v34
    %54 = vmatprep.subr.mxu0 0.0
    %55 = vmatpush1.msra.mxu0 %v35
    %56 = vmatprep.subr.mxu0 0.0
    %57 = vmatpush1.msra.mxu0 %v36
    %58 = vmatprep.subr.mxu0 0.0
    %59 = vmatpush1.msra.mxu0 0.0
    %60 = vmatprep.subr.mxu0 0.0
    %61 = vmatpush1.msra.mxu0 0.0
    %62 = vmatprep.subr.mxu0 0.0
    %63 = vmatpush1.msra.mxu0 0.0
    %64 = vmatprep.subr.mxu0 0.0
    %65 = vmatpush1.msra.mxu0 0.0
    %66 = vmatprep.subr.mxu0 0.0
    %67 = vmatpush1.msra.mxu0 0.0
    %68 = vmatprep.subr.mxu0 0.0
    %69 = vmatpush1.msra.mxu0 0.0
    %70 = vmatprep.subr.mxu0 0.0
    %71 = vmatpush1.msra.mxu0 0.0
    %72 = vmatprep.subr.mxu0 0.0
    %73 = vmatpush1.msra.mxu0 0.0
    %74 = vmatprep.subr.mxu0 0.0
    %75 = vmatpush1.msra.mxu0 0.0
    %76 = vmatprep.subr.mxu0 0.0
    %77 = vmatpush1.msra.mxu0 0.0
    %78 = vmatprep.subr.mxu0 0.0
    %79 = vmatpush1.msra.mxu0 0.0
    %80 = vmatprep.subr.mxu0 0.0
    %81 = vmatpush1.msra.mxu0 0.0
    %82 = vmatprep.subr.mxu0 0.0
    %83 = vmatpush1.msra.mxu0 0.0
    %84 = vmatprep.subr.mxu0 0.0
    %85 = vmatpush1.msra.mxu0 0.0
    %86 = vmatprep.subr.mxu0 0.0
    %87 = vmatpush1.msra.mxu0 0.0
    %88 = vmatprep.subr.mxu0 0.0
    %89 = vmatpush1.msra.mxu0 0.0
    %90 = vmatprep.subr.mxu0 0.0
    %91 = vmatpush1.msra.mxu0 0.0
    %92 = vmatprep.subr.mxu0 0.0
    %93 = vmatpush1.msra.mxu0 0.0
    %94 = vmatprep.subr.mxu0 0.0
    %95 = vmatpush1.msra.mxu0 0.0
    %96 = vmatprep.subr.mxu0 0.0
    %97 = vmatpush1.msra.mxu0 0.0
    %98 = vmatprep.subr.mxu0 0.0
    %99 = vmatpush1.msra.mxu0 0.0
    %100 = vmatprep.subr.mxu0 0.0
    %101 = vmatpush1.msra.mxu0 0.0
    %102 = vmatprep.subr.mxu0 0.0
    %103 = vmatpush1.msra.mxu0 0.0
    %104 = vmatprep.subr.mxu0 0.0
    %105 = vmatpush1.msra.mxu0 0.0
    %106 = vmatprep.subr.mxu0 0.0
    %107 = vmatpush1.msra.mxu0 0.0
    %108 = vmatprep.subr.mxu0 0.0
    %109 = vmatpush1.msra.mxu0 0.0
    %110 = vmatprep.subr.mxu0 0.0
    %111 = vmatpush1.msra.mxu0 0.0
    %112 = vmatprep.subr.mxu0 0.0
    %113 = vmatpush1.msra.mxu0 0.0
    %114 = vmatprep.mubr.f32.mxu0 0.0
    %115 = vmatmul.mubr.f32.gmra.mrb[0].mxu0 %v39
    %v116 = vpop.f32.mrb[0].mxu0
    %v117 = vadd.f32 0.0, %v116
    %v118 = vpop.f32.mrb[0].mxu0
    %119 = vmatprep.mubr.f32.mxu0 0.0
    %120 = vmatmul.mubr.f32.gmra.mrb[0].mxu0 %v42
    %v121 = vpop.f32.mrb[0].mxu0
    %v122 = vadd.f32 0.0, %v121
    %v123 = vpop.f32.mrb[0].mxu0
    %124 = vmatprep.mubr.f32.mxu0 0.0
    %125 = vmatmul.mubr.f32.gmra.mrb[0].mxu0 %v45
    %v126 = vpop.f32.mrb[0].mxu0
    %v127 = vadd.f32 0.0, %v126
    %v128 = vpop.f32.mrb[0].mxu0
    %129 = vmatprep.mubr.f32.mxu0 0.0
    %130 = vmatmul.mubr.f32.gmra.mrb[0].mxu0 %v48
    %v131 = vpop.f32.mrb[0].mxu0
    %v132 = vadd.f32 0.0, %v131
    %v133 = vpop.f32.mrb[0].mxu0
    %134 = vdwg.mxu0
    %v135 = vtanh.pop %v117
    %v136 = vtanh.pop %v122
    %v137 = vtanh.pop %v127
    %v138 = vtanh.pop %v132
    %v139 = vld [vmem:[%s1] sm:$0xff]
    %v140 = vld [vmem:[%s1 + $0x8] sm:$0xff]
    %v141 = vld [vmem:[%s1 + $0x10] sm:$0xff]
    %v142 = vld [vmem:[%s1 + $0x18] sm:$0xff]
    %144 = vset.pattern.permute.xlu0 0
    %145 = vperm.xlu0 %144, %v139
    %v146 = vpop.permute.xlu0 %145
    %149 = vset.pattern.permute.xlu0 0
    %150 = vperm.xlu0 %149, %v140
    %v151 = vpop.permute.xlu0 %150
    %154 = vset.pattern.permute.xlu0 0
    %155 = vperm.xlu0 %154, %v141
    %v156 = vpop.permute.xlu0 %155
    %159 = vset.pattern.permute.xlu0 0
    %160 = vperm.xlu0 %159, %v142
    %v161 = vpop.permute.xlu0 %160
    %v163 = vmul.f32 %v146, %v135
    %v164 = vmul.f32 %v151, %v136
    %v165 = vmul.f32 %v156, %v137
    %v166 = vmul.f32 %v161, %v138
    %v167 = vadd.f32 %v163, %v164
    %v168 = vadd.f32 %v167, %v165
    %v169 = vadd.f32 %v168, %v166
    %v170 = vrot.slane %v169, 4
    %v171 = vadd.f32 %v169, %v170
    %v172 = vrot.slane %v171, 2
    %v173 = vadd.f32 %v171, %v172
    %v174 = vrot.slane %v173, 1
    %v175 = vadd.f32 %v173, %v174
    %177 = vrot.lane.b32.xlu0 %v175, 112
    %v178 = vpop.permute.xlu0 %177
    %v180 = vmax.f32 %v175, %v178
    %181 = vrot.lane.b32.xlu0 %v175, 96
    %v182 = vpop.permute.xlu0 %181
    %v184 = vmax.f32 %v180, %v182
    %185 = vrot.lane.b32.xlu0 %v175, 80
    %v186 = vpop.permute.xlu0 %185
    %v188 = vmax.f32 %v184, %v186
    %189 = vrot.lane.b32.xlu0 %v175, 64
    %v190 = vpop.permute.xlu0 %189
    %v192 = vmax.f32 %v188, %v190
    %193 = vrot.lane.b32.xlu0 %v175, 48
    %v194 = vpop.permute.xlu0 %193
    %v196 = vmax.f32 %v192, %v194
    %197 = vrot.lane.b32.xlu0 %v175, 32
    %v198 = vpop.permute.xlu0 %197
    %v200 = vmax.f32 %v196, %v198
    %201 = vrot.lane.b32.xlu0 %v175, 16
    %v202 = vpop.permute.xlu0 %201
    %v204 = vmax.f32 %v200, %v202
    %v205 = vsub.f32 %v175, %v204
    %v206 = vmul.f32 %v205, 1.442695
    %v207 = vpow.pop %v206
    %209 = vrot.lane.b32.xlu0 %v204, 16
    %v210 = vpop.permute.xlu0 %209
    %v212 = vsub.f32 %v175, %v210
    %v213 = vmul.f32 %v212, 1.442695
    %v214 = vpow.pop %v213
    %215 = vrot.lane.b32.xlu0 %v204, 32
    %v216 = vpop.permute.xlu0 %215
    %v218 = vsub.f32 %v175, %v216
    %v219 = vmul.f32 %v218, 1.442695
    %v220 = vpow.pop %v219
    %221 = vrot.lane.b32.xlu0 %v204, 48
    %v222 = vpop.permute.xlu0 %221
    %v224 = vsub.f32 %v175, %v222
    %v225 = vmul.f32 %v224, 1.442695
    %v226 = vpow.pop %v225
    %227 = vrot.lane.b32.xlu0 %v204, 64
    %v228 = vpop.permute.xlu0 %227
    %v230 = vsub.f32 %v175, %v228
    %v231 = vmul.f32 %v230, 1.442695
    %v232 = vpow.pop %v231
    %233 = vrot.lane.b32.xlu0 %v204, 80
    %v234 = vpop.permute.xlu0 %233
    %v236 = vsub.f32 %v175, %v234
    %v237 = vmul.f32 %v236, 1.442695
    %v238 = vpow.pop %v237
    %239 = vrot.lane.b32.xlu0 %v204, 96
    %v240 = vpop.permute.xlu0 %239
    %v242 = vsub.f32 %v175, %v240
    %v243 = vmul.f32 %v242, 1.442695
    %v244 = vpow.pop %v243
    %245 = vrot.lane.b32.xlu0 %v204, 112
    %v246 = vpop.permute.xlu0 %245
    %v248 = vsub.f32 %v175, %v246
    %v249 = vmul.f32 %v248, 1.442695
    %v250 = vpow.pop %v249
    %252 = vrot.lane.b32.xlu0 %v214, 112
    %v253 = vpop.permute.xlu0 %252
    %v255 = vadd.f32 %v207, %v253
    %257 = vrot.lane.b32.xlu0 %v220, 96
    %v258 = vpop.permute.xlu0 %257
    %v260 = vadd.f32 %v255, %v258
    %262 = vrot.lane.b32.xlu0 %v226, 80
    %v263 = vpop.permute.xlu0 %262
    %v265 = vadd.f32 %v260, %v263
    %267 = vrot.lane.b32.xlu0 %v232, 64
    %v268 = vpop.permute.xlu0 %267
    %v270 = vadd.f32 %v265, %v268
    %272 = vrot.lane.b32.xlu0 %v238, 48
    %v273 = vpop.permute.xlu0 %272
    %v275 = vadd.f32 %v270, %v273
    %277 = vrot.lane.b32.xlu0 %v244, 32
    %v278 = vpop.permute.xlu0 %277
    %v280 = vadd.f32 %v275, %v278
    %282 = vrot.lane.b32.xlu0 %v250, 16
    %v283 = vpop.permute.xlu0 %282
    %v285 = vadd.f32 %v280, %v283
    %v286 = vrcp.pop %v285
    %v287 = vmul.f32 1.0, %v286
    %v288 = vmul.f32 %v207, %v287
    %290 = vrot.lane.b32.xlu0 %v287, 16
    %v291 = vpop.permute.xlu0 %290
    %v293 = vmul.f32 %v214, %v291
    %294 = vrot.lane.b32.xlu0 %v287, 32
    %v295 = vpop.permute.xlu0 %294
    %v297 = vmul.f32 %v220, %v295
    %298 = vrot.lane.b32.xlu0 %v287, 48
    %v299 = vpop.permute.xlu0 %298
    %v301 = vmul.f32 %v226, %v299
    %302 = vrot.lane.b32.xlu0 %v287, 64
    %v303 = vpop.permute.xlu0 %302
    %v305 = vmul.f32 %v232, %v303
    %306 = vrot.lane.b32.xlu0 %v287, 80
    %v307 = vpop.permute.xlu0 %306
    %v309 = vmul.f32 %v238, %v307
    %310 = vrot.lane.b32.xlu0 %v287, 96
    %v311 = vpop.permute.xlu0 %310
    %v313 = vmul.f32 %v244, %v311
    %314 = vrot.lane.b32.xlu0 %v287, 112
    %v315 = vpop.permute.xlu0 %314
    %v317 = vmul.f32 %v250, %v315
    %vm318 = vcmask 130048
    %v319 = vsel %vm318, %v288, %v293
    %v320 = vsel %vm37, %v319, %v297
    %vm321 = vcmask 392192
    %v322 = vsel %vm321, %v320, %v301
    %vm323 = vcmask 523264
    %v324 = vsel %vm323, %v322, %v305
    %vm325 = vcmask 654336
    %v326 = vsel %vm325, %v324, %v309
    %vm327 = vcmask 785408
    %v328 = vsel %vm327, %v326, %v313
    %vm329 = vcmask 916480
    %v330 = vsel %vm329, %v328, %v317
    %331 = vst [vmem:[#allocation5] sm:$0x1] %v330
    // Predicated region
    $region18: #{tpu_custom_call.1} parent=1 // pred_check
      _
    $region19: #{tpu_custom_call.1} parent=1 // pred_check_branch
      %333 = sbr.rel (0) target = $region21
    $region20: #{tpu_custom_call.1} parent=1 // pred_region
      %s335 = ssub.s32 16, 16
      %336 = vsyncadd [#allocation4], %s335
      %s338 = sshll.u32 [#allocation5], 4
      %s339 = int_to_ptr.vmem [resolvable:$true] %s338
      %341 = dma.vmem_to_hbm [thread:$0]  %s339, 16, %s3, [#allocation4]
    $region21: #{tpu_custom_call.1} parent=1 // pred_fallthru
      _
    // Predicated region
    $region22: #{tpu_custom_call.1} parent=1 // pred_check
      _
    $region23: #{tpu_custom_call.1} parent=1 // pred_check_branch
      %343 = sbr.rel (0) target = $region25
    $region24: #{tpu_custom_call.1} parent=1 // pred_region
      %344 = dma.done [#allocation4], 16
    $region25: #{tpu_custom_call.1} parent=1 // pred_fallthru
      _
    %345 = vsyncpa [#allocation3], 1
    %346 = vsyncpa [#allocation4], 1

</llo_original>
